<compile_context>
chip_gen: v5e
topology: v5e:2x2
jax: 0.10.0
libtpu: 0.0.40
codegen_flags: <defaults>
</compile_context>

<pallas_src>
import functools

import jax
import jax.numpy as jnp
from jax.experimental import pallas as pl
from jax.experimental.pallas import tpu as pltpu


def _round_up(x, m):
    return (x + m - 1) // m * m


def _choose_block_rows(n_rows, n_class):
    # Budget the double-buffered f32 pred tile at ~4 MiB so defaults fit the
    # v5e 16 MiB scoped-VMEM limit with plenty of headroom (also v7x's 64 MiB
    # physical / 32 MiB scoped).
    vmem_budget = 4 * 1024 * 1024
    by_vmem = vmem_budget // (2 * 4 * max(n_class, 1))
    tb = min(1024, _round_up(n_rows, 8), max(8, by_vmem))
    return max(8, (tb // 8) * 8)


def _smooth_ce_kernel(pred_ref, tgt_ref, out_ref, acc_ref, *,
                      eps, n_class, n_rows, block_rows):
    i = pl.program_id(0)

    @pl.when(i == 0)
    def _init():
        acc_ref[...] = jnp.zeros_like(acc_ref)

    pred = pred_ref[...].astype(jnp.float32)            # (TB, C)
    tgt = tgt_ref[...]                                   # (TB, 1) int32
    tb, c = pred.shape

    # Numerically stable pieces of log_softmax: z = pred - rowmax, lse = log(sum(exp(z)))
    m = jnp.max(pred, axis=1, keepdims=True)             # (TB, 1)
    z = pred - m
    lse = jnp.log(jnp.sum(jnp.exp(z), axis=1, keepdims=True))   # (TB, 1)

    # z at the target class via iota-compare + masked lane reduce (no one_hot tensor).
    col = jax.lax.broadcasted_iota(jnp.int32, (tb, c), 1)
    z_t = jnp.sum(jnp.where(col == tgt, z, 0.0), axis=1, keepdims=True)   # (TB, 1)
    sum_z = jnp.sum(z, axis=1, keepdims=True)                             # (TB, 1)

    # sum(smoothed) == 1  =>  loss_row = lse - [(1-eps)*z_t + eps/(C-1)*(sum_z - z_t)]
    eps_off = (eps / (n_class - 1)) if n_class > 1 else 0.0   # guard C == 1
    per_row = lse - ((1.0 - eps) * z_t + eps_off * (sum_z - z_t))         # (TB, 1)

    # Mask batch-padding rows (global row index >= true batch size contributes 0).
    row = i * block_rows + jax.lax.broadcasted_iota(jnp.int32, (tb, 1), 0)
    per_row = jnp.where(row < n_rows, per_row, 0.0)

    acc_ref[...] += jnp.sum(per_row, axis=0, keepdims=True)

    @pl.when(i == pl.num_programs(0) - 1)
    def _finalize():
        # Fold the mean's 1/B into the single final store.
        out_ref[...] = acc_ref[...] * (1.0 / n_rows)


def get_loss(pred, target, temp=None, *, smoothing: bool = True, block_rows=None):
    """Pallas equivalent of L3A/models/dgcnn_cls.py::get_loss.forward.

    pred:   (B, C) float logits
    target: (B,) integer class labels
    temp:   unused (kept for signature parity with the PyTorch module)
    """
    del temp  # not used by the reference forward pass
    B, C = pred.shape
    eps = 0.2 if smoothing else 0.0   # smoothing=False == plain cross_entropy (eps=0)

    tb = block_rows if block_rows is not None else _choose_block_rows(B, C)
    tb = max(8, (int(tb) // 8) * 8)
    b_pad = _round_up(B, tb)
    n_tiles = b_pad // tb

    target2d = target.reshape(B, 1).astype(jnp.int32)
    if b_pad != B:
        pred = jnp.pad(pred, ((0, b_pad - B), (0, 0)))
        target2d = jnp.pad(target2d, ((0, b_pad - B), (0, 0)))

    kernel = functools.partial(_smooth_ce_kernel, eps=eps, n_class=C,
                               n_rows=B, block_rows=tb)

    out = pl.pallas_call(
        kernel,
        out_shape=jax.ShapeDtypeStruct((1, 1), jnp.float32),
        grid=(n_tiles,),
        in_specs=[
            pl.BlockSpec((tb, C), lambda i: (i, 0)),   # pred tiles, double-buffered
            pl.BlockSpec((tb, 1), lambda i: (i, 0)),   # labels as (TB,1) int32
        ],
        out_specs=pl.BlockSpec((1, 1), lambda i: (0, 0)),   # resident accumulator target
        scratch_shapes=[pltpu.VMEM((1, 1), jnp.float32)],
        compiler_params=pltpu.CompilerParams(
            dimension_semantics=("arbitrary",)),   # carried accumulator -> arbitrary
    )(pred, target2d)
    return out[0, 0]


def _reference_loss(pred, target, smoothing=True):
    pred = pred.astype(jnp.float32)
    _, C = pred.shape
    eps = 0.2 if smoothing else 0.0
    one_hot = jax.nn.one_hot(target, C, dtype=jnp.float32)
    smoothed = one_hot * (1.0 - eps) + (1.0 - one_hot) * (eps / (C - 1))
    log_prb = jax.nn.log_softmax(pred, axis=1)
    return -(smoothed * log_prb).sum(axis=1).mean()


if __name__ == "__main__":
    key = jax.random.PRNGKey(0)
    k_pred, k_tgt, k_tmp = jax.random.split(key, 3)

    B, C = 37, 40                      # ModelNet40-like class count, odd batch
    pred = jax.random.normal(k_pred, (B, C), dtype=jnp.float32)
    target = jax.random.randint(k_tgt, (B,), 0, C, dtype=jnp.int32)
    temp = jax.random.normal(k_tmp, (B, 64), dtype=jnp.float32)  # unused input

    # Default tiling (single tile), forced multi-tile path (exercises row
    # masking + cross-step accumulation), and the smoothing=False path.
    loss = jax.block_until_ready(get_loss(pred, target, temp, smoothing=True))
    loss_tiled = jax.block_until_ready(
        get_loss(pred, target, temp, smoothing=True, block_rows=16))
    loss_ce = jax.block_until_ready(
        get_loss(pred, target, temp, smoothing=False))

    ref = _reference_loss(pred, target, smoothing=True)
    ref_ce = _reference_loss(pred, target, smoothing=False)

    assert jnp.allclose(loss, ref, rtol=1e-5, atol=1e-5), (loss, ref)
    assert jnp.allclose(loss_tiled, ref, rtol=1e-5, atol=1e-5), (loss_tiled, ref)
    assert jnp.allclose(loss_ce, ref_ce, rtol=1e-5, atol=1e-5), (loss_ce, ref_ce)

    print("KERNEL_OK")
</pallas_src>

<mosaic_0001>
module attributes {stable_mosaic.version = 11 : i64} {
  func.func @_smooth_ce_kernel(%arg0: i32, %arg1: memref<40x40xf32, #tpu.memory_space<vmem>>, %arg2: memref<40x1xi32, #tpu.memory_space<vmem>>, %arg3: memref<1x1xf32, #tpu.memory_space<vmem>>, %arg4: memref<1x1xf32, #tpu.memory_space<vmem>>) attributes {dimension_semantics = [#tpu.dimension_semantics<arbitrary>], iteration_bounds = array<i64: 1>, scalar_prefetch = 0 : i64, scratch_operands = 1 : i64, tpu.core_type = #tpu.core_type<tc>, window_params = [{transform_indices = @transform_0, window_bounds = array<i64: 40, 40>}, {transform_indices = @transform_1, window_bounds = array<i64: 40, 1>}, {pipeline_mode = #tpu.pipeline_mode<synchronous>, transform_indices = @transform_2, window_bounds = array<i64: 1, 1>}]} {
    %c0_i32 = arith.constant 0 : i32
    %0 = arith.cmpi eq, %arg0, %c0_i32 : i32
    %1 = arith.extui %0 : i1 to i32
    %c0_i32_0 = arith.constant 0 : i32
    %2 = arith.cmpi ne, %1, %c0_i32_0 : i32
    scf.if %2 {
      %cst_18 = arith.constant 0.000000e+00 : f32
      %45 = vector.broadcast %cst_18 : f32 to vector<1x1xf32>
      %c0_19 = arith.constant 0 : index
      %c0_20 = arith.constant 0 : index
      %46 = vector.load %arg4[%c0_19, %c0_20] : memref<1x1xf32, #tpu.memory_space<vmem>>, vector<1x1xf32>
      tpu.vector_store %arg4[%c0_19, %c0_20], %45 {strides = array<i32>} : memref<1x1xf32, #tpu.memory_space<vmem>>, vector<1x1xf32>,
    } else {
    }
    %c0 = arith.constant 0 : index
    %c0_1 = arith.constant 0 : index
    %3 = vector.load %arg1[%c0, %c0_1] : memref<40x40xf32, #tpu.memory_space<vmem>>, vector<40x40xf32>
    %c0_2 = arith.constant 0 : index
    %c0_3 = arith.constant 0 : index
    %4 = vector.load %arg2[%c0_2, %c0_3] : memref<40x1xi32, #tpu.memory_space<vmem>>, vector<40x1xi32>
    %cst = arith.constant dense<0xFF800000> : vector<40xf32>
    %5 = vector.multi_reduction <maximumf>, %3, %cst [1] : vector<40x40xf32> to vector<40xf32>
    %6 = vector.shape_cast %5 : vector<40xf32> to vector<40x1xf32>
    %7 = vector.broadcast %6 : vector<40x1xf32> to vector<40x40xf32>
    %8 = arith.subf %3, %7 : vector<40x40xf32>
    %9 = math.exp %8 : vector<40x40xf32>
    %cst_4 = arith.constant dense<0.000000e+00> : vector<40xf32>
    %10 = vector.multi_reduction <add>, %9, %cst_4 [1] : vector<40x40xf32> to vector<40xf32>
    %11 = vector.shape_cast %10 : vector<40xf32> to vector<40x1xf32>
    %12 = math.log %11 : vector<40x1xf32>
    %13 = tpu.iota {dimensions = array<i32: 1>} : vector<40x40xi32>
    %14 = vector.broadcast %4 : vector<40x1xi32> to vector<40x40xi32>
    %15 = arith.cmpi eq, %13, %14 : vector<40x40xi32>
    %cst_5 = arith.constant 0.000000e+00 : f32
    %16 = vector.broadcast %cst_5 : f32 to vector<40x40xf32>
    %17 = arith.select %15, %8, %16 : vector<40x40xi1>, vector<40x40xf32>
    %cst_6 = arith.constant dense<0.000000e+00> : vector<40xf32>
    %18 = vector.multi_reduction <add>, %17, %cst_6 [1] : vector<40x40xf32> to vector<40xf32>
    %19 = vector.shape_cast %18 : vector<40xf32> to vector<40x1xf32>
    %cst_7 = arith.constant dense<0.000000e+00> : vector<40xf32>
    %20 = vector.multi_reduction <add>, %8, %cst_7 [1] : vector<40x40xf32> to vector<40xf32>
    %21 = vector.shape_cast %20 : vector<40xf32> to vector<40x1xf32>
    %cst_8 = arith.constant 8.000000e-01 : f32
    %22 = vector.broadcast %cst_8 : f32 to vector<40x1xf32>
    %23 = arith.mulf %22, %19 : vector<40x1xf32>
    %24 = arith.subf %21, %19 : vector<40x1xf32>
    %cst_9 = arith.constant 0.00512820529 : f32
    %25 = vector.broadcast %cst_9 : f32 to vector<40x1xf32>
    %26 = arith.mulf %25, %24 : vector<40x1xf32>
    %27 = arith.addf %23, %26 : vector<40x1xf32>
    %28 = arith.subf %12, %27 : vector<40x1xf32>
    %c40_i32 = arith.constant 40 : i32
    %29 = arith.muli %arg0, %c40_i32 : i32
    %30 = tpu.iota {dimensions = array<i32: 0>} : vector<40x1xi32>
    %31 = vector.broadcast %29 : i32 to vector<40x1xi32>
    %32 = arith.addi %31, %30 : vector<40x1xi32>
    %c37_i32 = arith.constant 37 : i32
    %33 = vector.broadcast %c37_i32 : i32 to vector<40x1xi32>
    %34 = arith.cmpi slt, %32, %33 : vector<40x1xi32>
    %cst_10 = arith.constant 0.000000e+00 : f32
    %35 = vector.broadcast %cst_10 : f32 to vector<40x1xf32>
    %36 = arith.select %34, %28, %35 : vector<40x1xi1>, vector<40x1xf32>
    %c0_11 = arith.constant 0 : index
    %c0_12 = arith.constant 0 : index
    %37 = vector.load %arg4[%c0_11, %c0_12] : memref<1x1xf32, #tpu.memory_space<vmem>>, vector<1x1xf32>
    %cst_13 = arith.constant dense<0.000000e+00> : vector<1xf32>
    %38 = vector.multi_reduction <add>, %36, %cst_13 [0] : vector<40x1xf32> to vector<1xf32>
    %39 = vector.shape_cast %38 : vector<1xf32> to vector<1x1xf32>
    %40 = arith.addf %37, %39 : vector<1x1xf32>
    %c0_14 = arith.constant 0 : index
    %c0_15 = arith.constant 0 : index
    %41 = vector.load %arg4[%c0_14, %c0_15] : memref<1x1xf32, #tpu.memory_space<vmem>>, vector<1x1xf32>
    tpu.vector_store %arg4[%c0_14, %c0_15], %40 {strides = array<i32>} : memref<1x1xf32, #tpu.memory_space<vmem>>, vector<1x1xf32>,
    %c0_i32_16 = arith.constant 0 : i32
    %42 = arith.cmpi eq, %arg0, %c0_i32_16 : i32
    %43 = arith.extui %42 : i1 to i32
    %c0_i32_17 = arith.constant 0 : i32
    %44 = arith.cmpi ne, %43, %c0_i32_17 : i32
    scf.if %44 {
      %c0_18 = arith.constant 0 : index
      %c0_19 = arith.constant 0 : index
      %45 = vector.load %arg4[%c0_18, %c0_19] : memref<1x1xf32, #tpu.memory_space<vmem>>, vector<1x1xf32>
      %cst_20 = arith.constant 0.0270270277 : f32
      %46 = vector.broadcast %cst_20 : f32 to vector<1x1xf32>
      %47 = arith.mulf %45, %46 : vector<1x1xf32>
      %c0_21 = arith.constant 0 : index
      %c0_22 = arith.constant 0 : index
      %48 = vector.load %arg3[%c0_21, %c0_22] : memref<1x1xf32, #tpu.memory_space<vmem>>, vector<1x1xf32>
      tpu.vector_store %arg3[%c0_21, %c0_22], %47 {strides = array<i32>} : memref<1x1xf32, #tpu.memory_space<vmem>>, vector<1x1xf32>,
    } else {
    }
    return
  }
  func.func @transform_0(%arg0: i32) -> (i32, i32) {
    %c0_i32 = arith.constant 0 : i32
    %c0_i32_0 = arith.constant 0 : i32
    return %arg0, %c0_i32 : i32, i32
  }
  func.func @transform_1(%arg0: i32) -> (i32, i32) {
    %c0_i32 = arith.constant 0 : i32
    %c0_i32_0 = arith.constant 0 : i32
    return %arg0, %c0_i32 : i32, i32
  }
  func.func @transform_2(%arg0: i32) -> (i32, i32) {
    %c0_i32 = arith.constant 0 : i32
    %c0_i32_0 = arith.constant 0 : i32
    %c0_i32_1 = arith.constant 0 : i32
    return %c0_i32, %c0_i32_0 : i32, i32
  }
}

</mosaic_0001>

<llo_original>
// kernel: tpu_custom_call.1
$region0: #{tpu_custom_call.1}
  #allocation0 [shape = 'u32[]', space=smem, size = 0x4, offset = 0x4, fixed_abs, tag = 'smem constant byte address 0x4 - core index']
  #allocation1 [shape = 'u32[72,128]{1,0:T(1,128)}', space=vmem, size = 0x9000, scoped, tag = 'internal scratch']
  #allocation2 [shape = 'f32[1,1]{1,0:T(1,128)}', space=vmem, size = 0x200, scoped, tag = 'scratch operand']
  %s0 = inlined_call_operand.vmem [shape: f32[40,40], index: 0, kind: input, shape index: {}]
  %s1 = inlined_call_operand.vmem [shape: s32[40,1], index: 1, kind: input, shape index: {}]
  %s2 = inlined_call_operand.hbm [shape: f32[1,1], index: 2, kind: output, shape index: {}]
  %s3 = sld [smem:[#allocation0]]
  $region26: #{tpu_custom_call.1} parent=0
    _
  %s5 = ssub.s32 1, %s3
  %s6 = scalar_select 0, %s5, %s3
  $region1: #{tpu_custom_call.1} parent=0
    #allocation3 [shape = 'u8[512]{0}', space=vmem, size = 0x400, scoped, tag = 'output window, operand 0, single buffered']
    #allocation4 [shape = 's32[1]{0}', space=sflag, size = 0x4, scoped, tag = 'scoped memory for tpu_custom_call.1']
    %7 = vsyncpa [#allocation4], 0
    // Predicated region
    $region2: #{tpu_custom_call.1} parent=1 // pred_check
      _
    $region3: #{tpu_custom_call.1} parent=1 // pred_check_branch
      %9 = sbr.rel (0) target = $region5
    $region4: #{tpu_custom_call.1} parent=1 // pred_region
      _
    $region5: #{tpu_custom_call.1} parent=1 // pred_fallthru
      _
    // Predicated region
    $region6: #{tpu_custom_call.1} parent=1 // pred_check
      _
    $region7: #{tpu_custom_call.1} parent=1 // pred_check_branch
      %11 = sbr.rel (0) target = $region9
    $region8: #{tpu_custom_call.1} parent=1 // pred_region
      _
    $region9: #{tpu_custom_call.1} parent=1 // pred_fallthru
      _
    %p12 = scmp.eq.s32.totalorder 0, 0
    // Predicated region
    $region10: #{tpu_custom_call.1} parent=1 // pred_check
      %p13 = pneg %p12
    $region11: #{tpu_custom_call.1} parent=1 // pred_check_branch
      %15 = sbr.rel (%p13) target = $region13
    $region12: #{tpu_custom_call.1} parent=1 // pred_region
      %vm16 = vcmask 0
      %17 = vst.msk [vmem:[#allocation2] sm:$0x1] %vm16, 0.0
    $region13: #{tpu_custom_call.1} parent=1 // pred_fallthru
      _
    %v18 = vld [vmem:[%s0] sm:$0xff]
    %v19 = vld [vmem:[%s0 + $0x8] sm:$0xff]
    %v20 = vld [vmem:[%s0 + $0x10] sm:$0xff]
    %v21 = vld [vmem:[%s0 + $0x18] sm:$0xff]
    %v22 = vld [vmem:[%s0 + $0x20] sm:$0xff]
    %v23 = vld [vmem:[%s1] sm:$0xff]
    %v24 = vld [vmem:[%s1 + $0x8] sm:$0xff]
    %v25 = vld [vmem:[%s1 + $0x10] sm:$0xff]
    %v26 = vld [vmem:[%s1 + $0x18] sm:$0xff]
    %v27 = vld [vmem:[%s1 + $0x20] sm:$0xff]
    %vm28 = vcmask 326656
    %v29 = vsel %vm28, %v18, -inf
    %30 = vmax.xlane.f32.xlu0 %v29
    %v31 = vpop.xlane.xlu0 %30
    %v32 = vsel %vm28, %v19, -inf
    %33 = vmax.xlane.f32.xlu0 %v32
    %v34 = vpop.xlane.xlu0 %33
    %v35 = vsel %vm28, %v20, -inf
    %36 = vmax.xlane.f32.xlu0 %v35
    %v37 = vpop.xlane.xlu0 %36
    %v38 = vsel %vm28, %v21, -inf
    %39 = vmax.xlane.f32.xlu0 %v38
    %v40 = vpop.xlane.xlu0 %39
    %v41 = vsel %vm28, %v22, -inf
    %42 = vmax.xlane.f32.xlu0 %v41
    %v43 = vpop.xlane.xlu0 %42
    %v44 = vsub.f32 %v18, %v31
    %v45 = vsub.f32 %v19, %v34
    %v46 = vsub.f32 %v20, %v37
    %v47 = vsub.f32 %v21, %v40
    %v48 = vsub.f32 %v22, %v43
    %v49 = vmul.f32 %v44, 1.442695
    %v50 = vpow.pop %v49
    %v51 = vmul.f32 %v45, 1.442695
    %v52 = vpow.pop %v51
    %v53 = vmul.f32 %v46, 1.442695
    %v54 = vpow.pop %v53
    %v55 = vmul.f32 %v47, 1.442695
    %v56 = vpow.pop %v55
    %v57 = vmul.f32 %v48, 1.442695
    %v58 = vpow.pop %v57
    %v59 = vsel %vm28, %v50, 0.0
    %60 = vadd.xlane.f32.xlu0 %v59
    %v61 = vpop.xlane.xlu0 %60
    %v62 = vsel %vm28, %v52, 0.0
    %63 = vadd.xlane.f32.xlu0 %v62
    %v64 = vpop.xlane.xlu0 %63
    %v65 = vsel %vm28, %v54, 0.0
    %66 = vadd.xlane.f32.xlu0 %v65
    %v67 = vpop.xlane.xlu0 %66
    %v68 = vsel %vm28, %v56, 0.0
    %69 = vadd.xlane.f32.xlu0 %v68
    %v70 = vpop.xlane.xlu0 %69
    %v71 = vsel %vm28, %v58, 0.0
    %72 = vadd.xlane.f32.xlu0 %v71
    %v73 = vpop.xlane.xlu0 %72
    %v74 = vlog2.pop %v61
    %v75 = vmul.f32 %v74, 0.6931472
    %v76 = vlog2.pop %v64
    %v77 = vmul.f32 %v76, 0.6931472
    %v78 = vlog2.pop %v67
    %v79 = vmul.f32 %v78, 0.6931472
    %v80 = vlog2.pop %v70
    %v81 = vmul.f32 %v80, 0.6931472
    %v82 = vlog2.pop %v73
    %v83 = vmul.f32 %v82, 0.6931472
    %v84 = vlaneseq
    %v85 = vand.u32 %v84, 127
    %86 = vset.pattern.permute.xlu0 0
    %87 = vperm.xlu0 %86, %v23
    %v88 = vpop.permute.xlu0 %87
    %89 = vset.pattern.permute.xlu0 0
    %90 = vperm.xlu0 %89, %v24
    %v91 = vpop.permute.xlu0 %90
    %92 = vset.pattern.permute.xlu0 0
    %93 = vperm.xlu0 %92, %v25
    %v94 = vpop.permute.xlu0 %93
    %95 = vset.pattern.permute.xlu0 0
    %96 = vperm.xlu0 %95, %v26
    %v97 = vpop.permute.xlu0 %96
    %98 = vset.pattern.permute.xlu0 0
    %99 = vperm.xlu0 %98, %v27
    %v100 = vpop.permute.xlu0 %99
    %vm101 = vcmp.eq.s32.totalorder %v85, %v88
    %vm102 = vcmp.eq.s32.totalorder %v85, %v91
    %vm103 = vcmp.eq.s32.totalorder %v85, %v94
    %vm104 = vcmp.eq.s32.totalorder %v85, %v97
    %vm105 = vcmp.eq.s32.totalorder %v85, %v100
    %v106 = vsel %vm101, %v44, 0.0
    %v107 = vsel %vm102, %v45, 0.0
    %v108 = vsel %vm103, %v46, 0.0
    %v109 = vsel %vm104, %v47, 0.0
    %v110 = vsel %vm105, %v48, 0.0
    %v111 = vsel %vm28, %v106, 0.0
    %112 = vadd.xlane.f32.xlu0 %v111
    %v113 = vpop.xlane.xlu0 %112
    %v114 = vsel %vm28, %v107, 0.0
    %115 = vadd.xlane.f32.xlu0 %v114
    %v116 = vpop.xlane.xlu0 %115
    %v117 = vsel %vm28, %v108, 0.0
    %118 = vadd.xlane.f32.xlu0 %v117
    %v119 = vpop.xlane.xlu0 %118
    %v120 = vsel %vm28, %v109, 0.0
    %121 = vadd.xlane.f32.xlu0 %v120
    %v122 = vpop.xlane.xlu0 %121
    %v123 = vsel %vm28, %v110, 0.0
    %124 = vadd.xlane.f32.xlu0 %v123
    %v125 = vpop.xlane.xlu0 %124
    %v126 = vsel %vm28, %v44, 0.0
    %127 = vadd.xlane.f32.xlu0 %v126
    %v128 = vpop.xlane.xlu0 %127
    %v129 = vsel %vm28, %v45, 0.0
    %130 = vadd.xlane.f32.xlu0 %v129
    %v131 = vpop.xlane.xlu0 %130
    %v132 = vsel %vm28, %v46, 0.0
    %133 = vadd.xlane.f32.xlu0 %v132
    %v134 = vpop.xlane.xlu0 %133
    %v135 = vsel %vm28, %v47, 0.0
    %136 = vadd.xlane.f32.xlu0 %v135
    %v137 = vpop.xlane.xlu0 %136
    %v138 = vsel %vm28, %v48, 0.0
    %139 = vadd.xlane.f32.xlu0 %v138
    %v140 = vpop.xlane.xlu0 %139
    %v141 = vmul.f32 %v113, 0.8
    %v142 = vmul.f32 %v116, 0.8
    %v143 = vmul.f32 %v119, 0.8
    %v144 = vmul.f32 %v122, 0.8
    %v145 = vmul.f32 %v125, 0.8
    %v146 = vsub.f32 %v128, %v113
    %v147 = vsub.f32 %v131, %v116
    %v148 = vsub.f32 %v134, %v119
    %v149 = vsub.f32 %v137, %v122
    %v150 = vsub.f32 %v140, %v125
    %v151 = vmul.f32 %v146, 0.0051282053
    %v152 = vmul.f32 %v147, 0.0051282053
    %v153 = vmul.f32 %v148, 0.0051282053
    %v154 = vmul.f32 %v149, 0.0051282053
    %v155 = vmul.f32 %v150, 0.0051282053
    %v156 = vadd.f32 %v141, %v151
    %v157 = vadd.f32 %v142, %v152
    %v158 = vadd.f32 %v143, %v153
    %v159 = vadd.f32 %v144, %v154
    %v160 = vadd.f32 %v145, %v155
    %v161 = vsub.f32 %v75, %v156
    %v162 = vsub.f32 %v77, %v157
    %v163 = vsub.f32 %v79, %v158
    %v164 = vsub.f32 %v81, %v159
    %v165 = vsub.f32 %v83, %v160
    %s166 = smul.u32 0, 40
    %v167 = vlaneseq
    %v168 = vshrl.u32 %v167, 7
    %v169 = vadd.s32 %v168, 8
    %v170 = vadd.s32 %v168, 16
    %v171 = vadd.s32 %v168, 24
    %v172 = vadd.s32 %v168, 32
    %v173 = vstv %s166
    %v174 = vadd.s32 %v173, %v168
    %v175 = vadd.s32 %v173, %v169
    %v176 = vadd.s32 %v173, %v170
    %v177 = vadd.s32 %v173, %v171
    %v178 = vadd.s32 %v173, %v172
    %vm179 = vcmp.lt.s32.totalorder %v174, 37
    %vm180 = vcmp.lt.s32.totalorder %v175, 37
    %vm181 = vcmp.lt.s32.totalorder %v176, 37
    %vm182 = vcmp.lt.s32.totalorder %v177, 37
    %vm183 = vcmp.lt.s32.totalorder %v178, 37
    %v184 = vsel %vm179, %v161, 0.0
    %v185 = vsel %vm180, %v162, 0.0
    %v186 = vsel %vm181, %v163, 0.0
    %v187 = vsel %vm182, %v164, 0.0
    %v188 = vsel %vm183, %v165, 0.0
    %v189 = vld [vmem:[#allocation2] sm:$0x1]
    %v190 = vadd.f32 %v184, %v185
    %v191 = vadd.f32 %v190, %v186
    %v192 = vadd.f32 %v191, %v187
    %v193 = vadd.f32 %v192, %v188
    %v194 = vrot.slane %v193, 4
    %v195 = vadd.f32 %v193, %v194
    %v196 = vrot.slane %v195, 2
    %v197 = vadd.f32 %v195, %v196
    %v198 = vrot.slane %v197, 1
    %v199 = vadd.f32 %v197, %v198
    %v200 = vadd.f32 %v189, %v199
    %vm201 = vcmask 0
    %202 = vst.msk [vmem:[#allocation2] sm:$0x1] %vm201, %v200
    // Predicated region
    $region14: #{tpu_custom_call.1} parent=1 // pred_check
      %p203 = pneg %p12
    $region15: #{tpu_custom_call.1} parent=1 // pred_check_branch
      %205 = sbr.rel (%p203) target = $region17
    $region16: #{tpu_custom_call.1} parent=1 // pred_region
      %v206 = vld [vmem:[#allocation2] sm:$0x1]
      %v207 = vmul.f32 %v206, 0.027027028
      %208 = vst.msk [vmem:[#allocation3] sm:$0x1] %vm201, %v207
    $region17: #{tpu_custom_call.1} parent=1 // pred_fallthru
      _
    // Predicated region
    $region18: #{tpu_custom_call.1} parent=1 // pred_check
      _
    $region19: #{tpu_custom_call.1} parent=1 // pred_check_branch
      %210 = sbr.rel (0) target = $region21
    $region20: #{tpu_custom_call.1} parent=1 // pred_region
      %212 = vsyncadd [#allocation4], 0
      %s214 = sshll.u32 [#allocation3], 4
      %s215 = int_to_ptr.vmem [resolvable:$true] %s214
      %s216 = sshll.u32 %s2, 4
      %s217 = int_to_ptr.hbm [resolvable:$true] %s216
      %219 = dma.vmem_to_hbm [thread:$0]  %s215, 16, %s217, [#allocation4]
    $region21: #{tpu_custom_call.1} parent=1 // pred_fallthru
      _
    // Predicated region
    $region22: #{tpu_custom_call.1} parent=1 // pred_check
      _
    $region23: #{tpu_custom_call.1} parent=1 // pred_check_branch
      %221 = sbr.rel (0) target = $region25
    $region24: #{tpu_custom_call.1} parent=1 // pred_region
      %223 = dma.done [#allocation4], 16
    $region25: #{tpu_custom_call.1} parent=1 // pred_fallthru
      _
    %224 = vsyncpa [#allocation4], 1

</llo_original>
